<compile_context>
chip_gen: v7x
topology: tpu7x:2x2x1
jax: 0.10.0
libtpu: 0.0.40
codegen_flags: <defaults>
</compile_context>

<pallas_src>
import functools
import math

import jax
import jax.numpy as jnp
from jax.experimental import pallas as pl
from jax.experimental.pallas import tpu as pltpu

_INV_SQRT2 = 0.7071067811865476


def _round_up(x, m):
    return ((x + m - 1) // m) * m


def _vmem_capacity_bytes():
    try:
        return int(pltpu.get_tpu_info().vmem_capacity_bytes)
    except Exception:
        return 64 << 20  # conservative: v7x per-TensorCore VMEM


def _ffn_kernel(x_ref, w1_ref, b1_ref, w2_ref, b2_ref, o_ref, acc_ref, *,
                n_h, approx_gelu):
    # x_ref : (tm, C_in_p)   x dtype (cast to bf16 here)
    # w1_ref: (C_in_p, th)   bf16      b1_ref: (1, th)      f32
    # w2_ref: (th, C_out_p)  bf16      b2_ref: (1, C_out_p) f32
    # o_ref : (tm, C_out_p)  out dtype
    # acc_ref: (tm, C_out_p) f32 scratch, resident across the hidden (reduction) axis
    j = pl.program_id(1)

    # fc1 slice: bf16 x bf16 -> f32 accumulate on the MXU
    h = jnp.dot(x_ref[...].astype(jnp.bfloat16), w1_ref[...],
                preferred_element_type=jnp.float32)
    h = h + b1_ref[...]

    if approx_gelu:
        # tanh approximation runs on the EUP slot (frees VALU)
        h = jax.nn.gelu(h, approximate=True)
    else:
        # exact GELU (PyTorch nn.GELU default): 0.5 * x * (1 + erf(x / sqrt(2)))
        h = 0.5 * h * (1.0 + jax.lax.erf(h * jnp.float32(_INV_SQRT2)))

    # drop1: identity (eval mode)

    # fc2 partial for this hidden slab
    partial = jnp.dot(h.astype(jnp.bfloat16), w2_ref[...],
                      preferred_element_type=jnp.float32)

    if n_h == 1:
        # Single reduction step: skip the accumulator entirely.
        # drop2: identity (eval mode)
        o_ref[...] = (partial + b2_ref[...]).astype(o_ref.dtype)
    else:
        @pl.when(j == 0)
        def _first():
            acc_ref[...] = partial

        @pl.when((j > 0) & (j < n_h - 1))
        def _middle():
            acc_ref[...] += partial

        @pl.when(j == n_h - 1)
        def _last():
            # Fuse final partial + bias into the output store (no extra acc RMW).
            # drop2: identity (eval mode)
            o_ref[...] = (acc_ref[...] + partial + b2_ref[...]).astype(o_ref.dtype)


def prepare_ffn_params(w1, b1, w2, b2):
    """One-time weight pad + bf16 cast, hoisted out of the per-call path.

    w1: (C_in, H), b1: (H,), w2: (H, C_out), b2: (C_out,)."""
    C_in, H = w1.shape
    C_out = w2.shape[1]
    C_in_p = _round_up(C_in, 128)
    H_p = _round_up(H, 128)
    C_out_p = _round_up(C_out, 128)
    w1_p = jnp.pad(w1, ((0, C_in_p - C_in), (0, H_p - H))).astype(jnp.bfloat16)
    b1_p = jnp.pad(b1, (0, H_p - H)).reshape(1, H_p).astype(jnp.float32)
    w2_p = jnp.pad(w2, ((0, H_p - H), (0, C_out_p - C_out))).astype(jnp.bfloat16)
    b2_p = jnp.pad(b2, (0, C_out_p - C_out)).reshape(1, C_out_p).astype(jnp.float32)
    return {"w1": w1_p, "b1": b1_p, "w2": w2_p, "b2": b2_p,
            "dims": (C_in, H, C_out)}


def feed_forward(x, params, *, tm=512, th=512, approximate_gelu=False,
                 out_dtype=None):
    """x: (B, S, C_in) -> (B, S, C_out), using params from prepare_ffn_params."""
    B, S, C_in = x.shape
    C_in_ref, H, C_out = params["dims"]
    assert C_in == C_in_ref, (C_in, C_in_ref)
    w1_p, b1_p, w2_p, b2_p = params["w1"], params["b1"], params["w2"], params["b2"]
    C_in_p, H_p = w1_p.shape
    C_out_p = w2_p.shape[1]
    M = B * S
    out_dtype = out_dtype if out_dtype is not None else x.dtype

    # ---- row tile: default 512, clamped for tiny M, >=2 tiles when M is large ----
    tm = max(16, _round_up(min(tm, M), 16))
    if M >= 1024 and -(-M // tm) < 2:      # keep both v7x TensorCores busy
        tm = _round_up((M + 1) // 2, 16)

    # ---- hidden tile: largest multiple of 128 dividing H_p, <= request ----
    th_req = max(128, min(_round_up(th, 128), H_p))
    th = 128
    for t in range(128, th_req + 1, 128):
        if H_p % t == 0:
            th = t

    # ---- clamp tiles to a per-generation VMEM budget ----
    cap = _vmem_capacity_bytes()
    budget = min(int(cap * 0.75), 96 << 20)
    x_isz = jnp.dtype(x.dtype).itemsize
    o_isz = jnp.dtype(out_dtype).itemsize

    def vmem_need(tm_, th_):
        dbl = 2 * (tm_ * C_in_p * x_isz            # x block (double-buffered)
                   + C_in_p * th_ * 2 + th_ * 4    # w1 slab + b1 slab
                   + th_ * C_out_p * 2 + C_out_p * 4   # w2 slab + b2
                   + tm_ * C_out_p * o_isz)        # output block
        return dbl + tm_ * C_out_p * 4             # + resident f32 accumulator

    while vmem_need(tm, th) > budget and (th > 128 or tm > 128):
        if th > 128:
            nt = 128
            for t in range(128, th, 128):
                if H_p % t == 0:
                    nt = t
            th = nt
        elif tm > 128:
            tm = max(128, _round_up(tm // 2, 16))

    n_h = H_p // th

    # ---- x: skip the standalone pad/cast pass when already lane-aligned ----
    if C_in == C_in_p and M % tm == 0:
        x2 = x.reshape(M, C_in)       # native dtype; cast to bf16 inside the kernel
        M_p = M
    else:
        M_p = _round_up(M, tm)
        x2 = jnp.pad(x.reshape(M, C_in),
                     ((0, M_p - M), (0, C_in_p - C_in))).astype(jnp.bfloat16)

    grid = (M_p // tm, n_h)
    n_row = M_p // tm

    # Weights are re-streamed once per row tile.
    w_bytes = (w1_p.size + w2_p.size) * 2 + (b1_p.size + b2_p.size) * 4
    cost = pl.CostEstimate(
        flops=2 * M_p * (C_in_p * H_p + H_p * C_out_p),
        transcendentals=M_p * H_p,
        bytes_accessed=(x2.size * jnp.dtype(x2.dtype).itemsize
                        + n_row * w_bytes
                        + M_p * C_out_p * o_isz),
    )

    kernel = functools.partial(_ffn_kernel, n_h=n_h, approx_gelu=approximate_gelu)

    out2 = pl.pallas_call(
        kernel,
        out_shape=jax.ShapeDtypeStruct((M_p, C_out_p), out_dtype),
        grid_spec=pltpu.PrefetchScalarGridSpec(
            num_scalar_prefetch=0,
            grid=grid,
            in_specs=[
                pl.BlockSpec((tm, C_in_p), lambda i, j: (i, 0)),      # x rows (resident over j)
                pl.BlockSpec((C_in_p, th), lambda i, j: (0, j)),      # w1 H-slab
                pl.BlockSpec((1, th), lambda i, j: (0, j)),           # b1 H-slab
                pl.BlockSpec((th, C_out_p), lambda i, j: (j, 0)),     # w2 H-slab
                pl.BlockSpec((1, C_out_p), lambda i, j: (0, 0)),      # b2
            ],
            out_specs=pl.BlockSpec((tm, C_out_p), lambda i, j: (i, 0)),
            scratch_shapes=[pltpu.VMEM((tm, C_out_p), jnp.float32)],
        ),
        compiler_params=pltpu.CompilerParams(
            dimension_semantics=("parallel", "arbitrary"),
            vmem_limit_bytes=max(32 << 20, min(cap * 7 // 8, 112 << 20)),
        ),
        cost_estimate=cost,
    )(x2, w1_p, b1_p, w2_p, b2_p)

    return out2[:M, :C_out].reshape(B, S, C_out)


def _init_linear(key, fan_in, fan_out, dtype=jnp.float32):
    """PyTorch-style uniform init: U(-1/sqrt(fan_in), 1/sqrt(fan_in)).
    Weight returned already transposed to (fan_in, fan_out); bias (fan_out,)."""
    kw, kb = jax.random.split(key)
    bound = 1.0 / math.sqrt(fan_in)
    w = jax.random.uniform(kw, (fan_in, fan_out), dtype, -bound, bound)
    b = jax.random.uniform(kb, (fan_out,), dtype, -bound, bound)
    return w, b


if __name__ == "__main__":
    key = jax.random.PRNGKey(0)

    def reference(x, w1, b1, w2, b2):
        # Matching mixed precision (bf16 operands, f32 accumulate), exact GELU,
        # eval-mode dropout = identity.
        h = jnp.dot(x.astype(jnp.bfloat16), w1.astype(jnp.bfloat16),
                    preferred_element_type=jnp.float32) + b1
        h = 0.5 * h * (1.0 + jax.lax.erf(h * jnp.float32(_INV_SQRT2)))
        return jnp.dot(h.astype(jnp.bfloat16), w2.astype(jnp.bfloat16),
                       preferred_element_type=jnp.float32) + b2

    kx, k1, k2, kx2, k3, k4 = jax.random.split(key, 6)

    # Test 1: module defaults (in=32, hidden=256, out=32). Unaligned dims exercise
    # the padded path; th=128 exercises the multi-step hidden reduction/accumulator.
    B, S = 2, 8
    in_f, hid_f, out_f = 32, 256, 32
    x = jax.random.normal(kx, (B, S, in_f), dtype=jnp.float32)
    w1, b1 = _init_linear(k1, in_f, hid_f)    # fc1
    w2, b2 = _init_linear(k2, hid_f, out_f)   # fc2
    params = prepare_ffn_params(w1, b1, w2, b2)   # one-time pad + bf16 cast
    y = jax.block_until_ready(feed_forward(x, params, th=128))
    y_ref = reference(x, w1, b1, w2, b2)
    assert y.shape == (B, S, out_f)
    assert jnp.allclose(y, y_ref, atol=2e-2, rtol=2e-2), (
        float(jnp.max(jnp.abs(y - y_ref))))

    # Test 2: lane-aligned dims (C_in = C_out = 128, M % tm == 0) exercise the
    # no-pad fast path and the single-step fused acc+bias output store.
    B2, S2 = 2, 64
    in2, hid2, out2_f = 128, 256, 128
    x_b = jax.random.normal(kx2, (B2, S2, in2), dtype=jnp.float32)
    w1b, b1b = _init_linear(k3, in2, hid2)
    w2b, b2b = _init_linear(k4, hid2, out2_f)
    params_b = prepare_ffn_params(w1b, b1b, w2b, b2b)
    y2 = jax.block_until_ready(feed_forward(x_b, params_b))
    y2_ref = reference(x_b, w1b, b1b, w2b, b2b)
    assert y2.shape == (B2, S2, out2_f)
    assert jnp.allclose(y2, y2_ref, atol=2e-2, rtol=2e-2), (
        float(jnp.max(jnp.abs(y2 - y2_ref))))

    print("KERNEL_OK")
</pallas_src>

<mosaic_0001>
module attributes {stable_mosaic.version = 11 : i64} {
  func.func @_ffn_kernel(%arg0: i32, %arg1: i32, %arg2: memref<16x128xbf16, #tpu.memory_space<vmem>>, %arg3: memref<128x128xbf16, #tpu.memory_space<vmem>>, %arg4: memref<1x128xf32, #tpu.memory_space<vmem>>, %arg5: memref<128x128xbf16, #tpu.memory_space<vmem>>, %arg6: memref<1x128xf32, #tpu.memory_space<vmem>>, %arg7: memref<16x128xf32, #tpu.memory_space<vmem>>, %arg8: memref<16x128xf32, #tpu.memory_space<vmem>>) attributes {dimension_semantics = [#tpu.dimension_semantics<parallel>, #tpu.dimension_semantics<arbitrary>], iteration_bounds = array<i64: 1, 2>, scalar_prefetch = 0 : i64, scratch_operands = 1 : i64, tpu.core_type = #tpu.core_type<tc>, window_params = [{transform_indices = @transform_0, window_bounds = array<i64: 16, 128>}, {transform_indices = @transform_1, window_bounds = array<i64: 128, 128>}, {transform_indices = @transform_2, window_bounds = array<i64: 1, 128>}, {transform_indices = @transform_3, window_bounds = array<i64: 128, 128>}, {pipeline_mode = #tpu.pipeline_mode<synchronous>, transform_indices = @transform_4, window_bounds = array<i64: 1, 128>}, {transform_indices = @transform_5, window_bounds = array<i64: 16, 128>}]} {
    %c0 = arith.constant 0 : index
    %c0_0 = arith.constant 0 : index
    %0 = vector.load %arg2[%c0, %c0_0] : memref<16x128xbf16, #tpu.memory_space<vmem>>, vector<16x128xbf16>
    %c0_1 = arith.constant 0 : index
    %c0_2 = arith.constant 0 : index
    %1 = vector.load %arg3[%c0_1, %c0_2] : memref<128x128xbf16, #tpu.memory_space<vmem>>, vector<128x128xbf16>
    %cst = arith.constant dense<0.000000e+00> : vector<16x128xf32>
    %2 = tpu.matmul %0, %1, %cst {dimension_numbers = #tpu.dot_dimension_numbers<[1], [0], [0], [1], [0, 0, 1, 1], [], []>} : vector<16x128xbf16>, vector<128x128xbf16>, vector<16x128xf32> -> vector<16x128xf32>
    %c0_3 = arith.constant 0 : index
    %c0_4 = arith.constant 0 : index
    %3 = vector.load %arg4[%c0_3, %c0_4] : memref<1x128xf32, #tpu.memory_space<vmem>>, vector<1x128xf32>
    %4 = vector.broadcast %3 : vector<1x128xf32> to vector<16x128xf32>
    %5 = arith.addf %2, %4 : vector<16x128xf32>
    %cst_5 = arith.constant 5.000000e-01 : f32
    %6 = vector.broadcast %cst_5 : f32 to vector<16x128xf32>
    %7 = arith.mulf %6, %5 : vector<16x128xf32>
    %cst_6 = arith.constant 0.707106769 : f32
    %8 = vector.broadcast %cst_6 : f32 to vector<16x128xf32>
    %9 = arith.mulf %5, %8 : vector<16x128xf32>
    %10 = math.erf %9 : vector<16x128xf32>
    %cst_7 = arith.constant 1.000000e+00 : f32
    %11 = vector.broadcast %cst_7 : f32 to vector<16x128xf32>
    %12 = arith.addf %11, %10 : vector<16x128xf32>
    %13 = arith.mulf %7, %12 : vector<16x128xf32>
    %14 = arith.truncf %13 : vector<16x128xf32> to vector<16x128xbf16>
    %c0_8 = arith.constant 0 : index
    %c0_9 = arith.constant 0 : index
    %15 = vector.load %arg5[%c0_8, %c0_9] : memref<128x128xbf16, #tpu.memory_space<vmem>>, vector<128x128xbf16>
    %cst_10 = arith.constant dense<0.000000e+00> : vector<16x128xf32>
    %16 = tpu.matmul %14, %15, %cst_10 {dimension_numbers = #tpu.dot_dimension_numbers<[1], [0], [0], [1], [0, 0, 1, 1], [], []>} : vector<16x128xbf16>, vector<128x128xbf16>, vector<16x128xf32> -> vector<16x128xf32>
    %c0_i32 = arith.constant 0 : i32
    %17 = arith.cmpi eq, %arg1, %c0_i32 : i32
    %18 = arith.extui %17 : i1 to i32
    %c0_i32_11 = arith.constant 0 : i32
    %19 = arith.cmpi ne, %18, %c0_i32_11 : i32
    scf.if %19 {
      %c0_16 = arith.constant 0 : index
      %c0_17 = arith.constant 0 : index
      %28 = vector.load %arg8[%c0_16, %c0_17] : memref<16x128xf32, #tpu.memory_space<vmem>>, vector<16x128xf32>
      tpu.vector_store %arg8[%c0_16, %c0_17], %16 {strides = array<i32>} : memref<16x128xf32, #tpu.memory_space<vmem>>, vector<16x128xf32>,
    } else {
    }
    %c0_i32_12 = arith.constant 0 : i32
    %20 = arith.cmpi sgt, %arg1, %c0_i32_12 : i32
    %c1_i32 = arith.constant 1 : i32
    %21 = arith.cmpi slt, %arg1, %c1_i32 : i32
    %22 = arith.andi %20, %21 : i1
    %23 = arith.extui %22 : i1 to i32
    %c0_i32_13 = arith.constant 0 : i32
    %24 = arith.cmpi ne, %23, %c0_i32_13 : i32
    scf.if %24 {
      %c0_16 = arith.constant 0 : index
      %c0_17 = arith.constant 0 : index
      %28 = vector.load %arg8[%c0_16, %c0_17] : memref<16x128xf32, #tpu.memory_space<vmem>>, vector<16x128xf32>
      %29 = arith.addf %28, %16 : vector<16x128xf32>
      %c0_18 = arith.constant 0 : index
      %c0_19 = arith.constant 0 : index
      %30 = vector.load %arg8[%c0_18, %c0_19] : memref<16x128xf32, #tpu.memory_space<vmem>>, vector<16x128xf32>
      tpu.vector_store %arg8[%c0_18, %c0_19], %29 {strides = array<i32>} : memref<16x128xf32, #tpu.memory_space<vmem>>, vector<16x128xf32>,
    } else {
    }
    %c1_i32_14 = arith.constant 1 : i32
    %25 = arith.cmpi eq, %arg1, %c1_i32_14 : i32
    %26 = arith.extui %25 : i1 to i32
    %c0_i32_15 = arith.constant 0 : i32
    %27 = arith.cmpi ne, %26, %c0_i32_15 : i32
    scf.if %27 {
      %c0_16 = arith.constant 0 : index
      %c0_17 = arith.constant 0 : index
      %28 = vector.load %arg8[%c0_16, %c0_17] : memref<16x128xf32, #tpu.memory_space<vmem>>, vector<16x128xf32>
      %29 = arith.addf %28, %16 : vector<16x128xf32>
      %c0_18 = arith.constant 0 : index
      %c0_19 = arith.constant 0 : index
      %30 = vector.load %arg6[%c0_18, %c0_19] : memref<1x128xf32, #tpu.memory_space<vmem>>, vector<1x128xf32>
      %31 = vector.broadcast %30 : vector<1x128xf32> to vector<16x128xf32>
      %32 = arith.addf %29, %31 : vector<16x128xf32>
      %c0_20 = arith.constant 0 : index
      %c0_21 = arith.constant 0 : index
      %33 = vector.load %arg7[%c0_20, %c0_21] : memref<16x128xf32, #tpu.memory_space<vmem>>, vector<16x128xf32>
      tpu.vector_store %arg7[%c0_20, %c0_21], %32 {strides = array<i32>} : memref<16x128xf32, #tpu.memory_space<vmem>>, vector<16x128xf32>,
    } else {
    }
    return
  }
  func.func @transform_0(%arg0: i32, %arg1: i32) -> (i32, i32) {
    %c0_i32 = arith.constant 0 : i32
    %c0_i32_0 = arith.constant 0 : i32
    return %arg0, %c0_i32 : i32, i32
  }
  func.func @transform_1(%arg0: i32, %arg1: i32) -> (i32, i32) {
    %c0_i32 = arith.constant 0 : i32
    %c0_i32_0 = arith.constant 0 : i32
    return %c0_i32, %arg1 : i32, i32
  }
  func.func @transform_2(%arg0: i32, %arg1: i32) -> (i32, i32) {
    %c0_i32 = arith.constant 0 : i32
    %c0_i32_0 = arith.constant 0 : i32
    return %c0_i32, %arg1 : i32, i32
  }
  func.func @transform_3(%arg0: i32, %arg1: i32) -> (i32, i32) {
    %c0_i32 = arith.constant 0 : i32
    %c0_i32_0 = arith.constant 0 : i32
    return %arg1, %c0_i32 : i32, i32
  }
  func.func @transform_4(%arg0: i32, %arg1: i32) -> (i32, i32) {
    %c0_i32 = arith.constant 0 : i32
    %c0_i32_0 = arith.constant 0 : i32
    %c0_i32_1 = arith.constant 0 : i32
    return %c0_i32, %c0_i32_0 : i32, i32
  }
  func.func @transform_5(%arg0: i32, %arg1: i32) -> (i32, i32) {
    %c0_i32 = arith.constant 0 : i32
    %c0_i32_0 = arith.constant 0 : i32
    return %arg0, %c0_i32 : i32, i32
  }
}

</mosaic_0001>

<llo_original>
// kernel: tpu_custom_call.1
$region0: #{tpu_custom_call.1}
  #allocation0 [shape = 'u32[]', space=smem, size = 0x4, offset = 0x4, fixed_abs, tag = 'smem constant byte address 0x4 - core index']
  #allocation1 [shape = 'u32[144,128]{1,0:T(1,128)}', space=vmem, size = 0x12000, scoped, tag = 'internal scratch']
  #allocation2 [shape = 'f32[16,128]{1,0:T(8,128)}', space=vmem, size = 0x2000, scoped, tag = 'scratch operand']
  %s0 = inlined_call_operand.hbm [shape: bf16[16,128], index: 0, kind: input, shape index: {}]
  %s1 = inlined_call_operand.hbm [shape: bf16[128,256], index: 1, kind: input, shape index: {}]
  %s2 = inlined_call_operand.vmem [shape: f32[1,256], index: 2, kind: input, shape index: {}]
  %s3 = inlined_call_operand.hbm [shape: bf16[256,128], index: 3, kind: input, shape index: {}]
  %s4 = inlined_call_operand.vmem [shape: f32[1,128], index: 4, kind: input, shape index: {}]
  %s5 = inlined_call_operand.hbm [shape: f32[16,128], index: 5, kind: output, shape index: {}]
  %s6 = sld [smem:[#allocation0]]
  $region77: #{tpu_custom_call.1} parent=0
    _
  %s8 = ssub.s32 1, %s6
  %s9 = scalar_select 0, %s8, %s6
  $region1: #{tpu_custom_call.1} parent=0
    #allocation3 [shape = 'u8[4096]{0}', space=vmem, size = 0x1000, scoped, tag = 'input window, operand 0, single buffered']
    #allocation4 [shape = 's32[2]{0}', space=sflag, size = 0x8, scoped, tag = 'scoped memory for tpu_custom_call.1']
    #allocation5 [shape = 's32[2]{0}', space=sflag, size = 0x8, scoped, tag = 'scoped memory for tpu_custom_call.1']
    #allocation6 [shape = 'u8[65536]{0}', space=vmem, size = 0x10000, scoped, tag = 'input window, operand 1']
    #allocation7 [shape = 's32[2]{0}', space=sflag, size = 0x8, scoped, tag = 'scoped memory for tpu_custom_call.1']
    #allocation8 [shape = 'u8[65536]{0}', space=vmem, size = 0x10000, scoped, tag = 'input window, operand 3']
    #allocation9 [shape = 'u8[8192]{0}', space=vmem, size = 0x2000, scoped, tag = 'output window, operand 0, single buffered']
    %10 = vsyncpa [#allocation4], 0
    %11 = vsyncpa [#allocation7], 0
    %s12 = scalar_lea.sflag [#allocation7], 1
    %13 = vsyncpa %s12, 0
    %14 = vsyncpa [#allocation5], 0
    loop: start=0, step=1, limit=4
    $region2: #{tpu_custom_call.1} parent=1 // loop_pre_header
      _
    $region3: #{tpu_custom_call.1} parent=1 // loop_header
      %s16 = sphi 0, %s20
      %p17 = scmp.ge.s32.totalorder %s16, 4
      %s23 = sphi 0, %s35
      %s24 = sphi 0, %s31
      %s25 = sphi 0, %s23
      %s26 = sphi 0, %s24
      %s27 = sphi 0, %s25
      %s28 = sphi 0, %s26
      %s38 = sphi 0, %s40
      %s41 = sphi 0, %s38
      %s42 = sphi 0, %s41
      %s58 = sphi 0, %s42
      %s64 = sphi 0, %s66
      %s67 = sphi 0, %s64
      %s68 = sphi 0, %s67
      %s84 = sphi 0, %s68
      %s90 = sphi 0, %s92
      %s93 = sphi 0, %s90
      %s94 = sphi 0, %s93
      %s110 = sphi 0, %s94
      %s116 = sphi 0, %s118
      %s119 = sphi 0, %s116
      %s120 = sphi 0, %s119
      %s136 = sphi 0, %s120
      %s140 = sphi 0, %s140
      %s142 = sphi 0, %s140
      %s143 = sphi 0, %s142
      %s157 = sphi 0, %s143
      %s163 = sphi 0, %s165
      %s166 = sphi 0, %s163
      %s167 = sphi 0, %s166
      %s183 = sphi 0, %s167
    $region4: #{tpu_custom_call.1} parent=1 // loop_header_branch
      %19 = sbr.rel (%p17) target = $region8
    $region5: #{tpu_custom_call.1} parent=1 // loop_body
      %s21 = ssub.s32 %s16, 1
      %s22 = ssub.s32 %s16, 2
      %s29 = sadd.s32 1, %s24
      %p30 = scmp.ge.s32.totalorder %s29, 2
      %s31 = scalar_select %p30, 0, %s29
      %s32 = sadd.s32 1, %s23
      %s33 = scalar_select %p30, %s32, %s23
      %p34 = scmp.ge.s32.totalorder %s33, 1
      %s35 = scalar_select %p34, 0, %s33
      %s36 = ssub.s32 %s23, %s35
      %p37 = scmp.eq.s32.totalorder %s36, 0
      %s39 = sadd.s32 %s38, 1
      %s40 = scalar_select %p37, %s38, %s39
      %p43 = pneg %p37
      %p44 = scmp.eq.s32.totalorder %s16, 1
      %p45 = por %p43, %p44
      %p46 = scmp.ne.s32.totalorder %s38, %s41
      %p47 = scmp.eq.s32.totalorder %s16, 0
      %p48 = por %p46, %p47
      %p49 = scmp.ne.s32.totalorder %s38, %s41
      %p50 = scmp.eq.s32.totalorder %s21, 1
      %p51 = por %p49, %p50
      %p52 = scmp.ne.s32.totalorder %s41, %s42
      %p53 = scmp.eq.s32.totalorder %s21, 0
      %p54 = por %p52, %p53
      %p55 = scmp.ne.s32.totalorder %s41, %s42
      %p56 = scmp.eq.s32.totalorder %s22, 1
      %p57 = por %p55, %p56
      %p59 = scmp.ne.s32.totalorder %s42, %s58
      %p60 = scmp.eq.s32.totalorder %s22, 0
      %p61 = por %p59, %p60
      %s62 = ssub.s32 %s24, %s31
      %p63 = scmp.eq.s32.totalorder %s62, 0
      %s65 = sadd.s32 %s64, 1
      %s66 = scalar_select %p63, %s64, %s65
      %p69 = pneg %p63
      %p70 = scmp.eq.s32.totalorder %s16, 1
      %p71 = por %p69, %p70
      %p72 = scmp.ne.s32.totalorder %s64, %s67
      %p73 = scmp.eq.s32.totalorder %s16, 0
      %p74 = por %p72, %p73
      %p75 = scmp.ne.s32.totalorder %s64, %s67
      %p76 = scmp.eq.s32.totalorder %s21, 1
      %p77 = por %p75, %p76
      %p78 = scmp.ne.s32.totalorder %s67, %s68
      %p79 = scmp.eq.s32.totalorder %s21, 0
      %p80 = por %p78, %p79
      %p81 = scmp.ne.s32.totalorder %s67, %s68
      %p82 = scmp.eq.s32.totalorder %s22, 1
      %p83 = por %p81, %p82
      %p85 = scmp.ne.s32.totalorder %s68, %s84
      %p86 = scmp.eq.s32.totalorder %s22, 0
      %p87 = por %p85, %p86
      %s88 = ssub.s32 %s24, %s31
      %p89 = scmp.eq.s32.totalorder %s88, 0
      %s91 = sadd.s32 %s90, 1
      %s92 = scalar_select %p89, %s90, %s91
      %p95 = pneg %p89
      %p96 = scmp.eq.s32.totalorder %s16, 1
      %p97 = por %p95, %p96
      %p98 = scmp.ne.s32.totalorder %s90, %s93
      %p99 = scmp.eq.s32.totalorder %s16, 0
      %p100 = por %p98, %p99
      %p101 = scmp.ne.s32.totalorder %s90, %s93
      %p102 = scmp.eq.s32.totalorder %s21, 1
      %p103 = por %p101, %p102
      %p104 = scmp.ne.s32.totalorder %s93, %s94
      %p105 = scmp.eq.s32.totalorder %s21, 0
      %p106 = por %p104, %p105
      %p107 = scmp.ne.s32.totalorder %s93, %s94
      %p108 = scmp.eq.s32.totalorder %s22, 1
      %p109 = por %p107, %p108
      %p111 = scmp.ne.s32.totalorder %s94, %s110
      %p112 = scmp.eq.s32.totalorder %s22, 0
      %p113 = por %p111, %p112
      %s114 = ssub.s32 %s24, %s31
      %p115 = scmp.eq.s32.totalorder %s114, 0
      %s117 = sadd.s32 %s116, 1
      %s118 = scalar_select %p115, %s116, %s117
      %p121 = pneg %p115
      %p122 = scmp.eq.s32.totalorder %s16, 1
      %p123 = por %p121, %p122
      %p124 = scmp.ne.s32.totalorder %s116, %s119
      %p125 = scmp.eq.s32.totalorder %s16, 0
      %p126 = por %p124, %p125
      %p127 = scmp.ne.s32.totalorder %s116, %s119
      %p128 = scmp.eq.s32.totalorder %s21, 1
      %p129 = por %p127, %p128
      %p130 = scmp.ne.s32.totalorder %s119, %s120
      %p131 = scmp.eq.s32.totalorder %s21, 0
      %p132 = por %p130, %p131
      %p133 = scmp.ne.s32.totalorder %s119, %s120
      %p134 = scmp.eq.s32.totalorder %s22, 1
      %p135 = por %p133, %p134
      %p137 = scmp.ne.s32.totalorder %s120, %s136
      %p138 = scmp.eq.s32.totalorder %s22, 0
      %p139 = por %p137, %p138
      %s141 = sadd.s32 %s140, 1
      %p144 = scmp.eq.s32.totalorder %s16, 1
      %p145 = scmp.ne.s32.totalorder %s140, %s142
      %p146 = scmp.eq.s32.totalorder %s16, 0
      %p147 = por %p145, %p146
      %p148 = scmp.ne.s32.totalorder %s140, %s142
      %p149 = scmp.eq.s32.totalorder %s21, 1
      %p150 = por %p148, %p149
      %p151 = scmp.ne.s32.totalorder %s142, %s143
      %p152 = scmp.eq.s32.totalorder %s21, 0
      %p153 = por %p151, %p152
      %p154 = scmp.ne.s32.totalorder %s142, %s143
      %p155 = scmp.eq.s32.totalorder %s22, 1
      %p156 = por %p154, %p155
      %p158 = scmp.ne.s32.totalorder %s143, %s157
      %p159 = scmp.eq.s32.totalorder %s22, 0
      %p160 = por %p158, %p159
      %s161 = ssub.s32 %s23, %s35
      %p162 = scmp.eq.s32.totalorder %s161, 0
      %s164 = sadd.s32 %s163, 1
      %s165 = scalar_select %p162, %s163, %s164
      %p168 = pneg %p162
      %p169 = scmp.eq.s32.totalorder %s16, 1
      %p170 = por %p168, %p169
      %p171 = scmp.ne.s32.totalorder %s163, %s166
      %p172 = scmp.eq.s32.totalorder %s16, 0
      %p173 = por %p171, %p172
      %p174 = scmp.ne.s32.totalorder %s163, %s166
      %p175 = scmp.eq.s32.totalorder %s21, 1
      %p176 = por %p174, %p175
      %p177 = scmp.ne.s32.totalorder %s166, %s167
      %p178 = scmp.eq.s32.totalorder %s21, 0
      %p179 = por %p177, %p178
      %p180 = scmp.ne.s32.totalorder %s166, %s167
      %p181 = scmp.eq.s32.totalorder %s22, 1
      %p182 = por %p180, %p181
      %p184 = scmp.ne.s32.totalorder %s167, %s183
      %p185 = scmp.eq.s32.totalorder %s22, 0
      %p186 = por %p184, %p185
      %p187 = scmp.le.s32.totalorder 1, %s16
      %p188 = scmp.lt.s32.totalorder %s16, 3
      %p189 = pnand %p187, %p188
      %p190 = pneg %p189
      // Predicated region
      $region9: #{tpu_custom_call.1} parent=5 // pred_check
        _
      $region10: #{tpu_custom_call.1} parent=5 // pred_check_branch
        %192 = sbr.rel (%p189) target = $region12
      $region11: #{tpu_custom_call.1} parent=5 // pred_region
        %s193 = ssub.s32 %s16, 1
        // Predicated region
        $region13: #{tpu_custom_call.1} parent=11 // pred_check
          %p194 = pneg %p54
        $region14: #{tpu_custom_call.1} parent=11 // pred_check_branch
          %196 = sbr.rel (%p194) target = $region16
        $region15: #{tpu_custom_call.1} parent=11 // pred_region
          %s197 = smul.u32 2, %s25
          %s199 = ssub.s32 128, 128
          %200 = vsyncadd [#allocation4], %s199
          %s201 = smul.addr %s197, 64
          %s202 = scalar_lea.hbm %s0, %s201
          %s203 = sshll.u32 [#allocation3], 4
          %s204 = int_to_ptr.vmem [resolvable:$true] %s203
          %209 = dma.hbm_to_vmem [thread:$0]  %s202, 128, %s204, [#allocation4], 64, 64, 4
        $region16: #{tpu_custom_call.1} parent=11 // pred_fallthru
          _
        // Predicated region
        $region17: #{tpu_custom_call.1} parent=11 // pred_check
          %p210 = pneg %p153
        $region18: #{tpu_custom_call.1} parent=11 // pred_check_branch
          %212 = sbr.rel (%p210) target = $region20
        $region19: #{tpu_custom_call.1} parent=11 // pred_region
          _
        $region20: #{tpu_custom_call.1} parent=11 // pred_fallthru
          _
      $region12: #{tpu_custom_call.1} parent=5 // pred_fallthru
        _
      %p213 = scmp.lt.s32.totalorder %s16, 2
      // Predicated region
      $region21: #{tpu_custom_call.1} parent=5 // pred_check
        %p214 = pneg %p213
      $region22: #{tpu_custom_call.1} parent=5 // pred_check_branch
        %216 = sbr.rel (%p214) target = $region24
      $region23: #{tpu_custom_call.1} parent=5 // pred_region
        // Predicated region
        $region25: #{tpu_custom_call.1} parent=23 // pred_check
          %p217 = pneg %p74
        $region26: #{tpu_custom_call.1} parent=23 // pred_check_branch
          %219 = sbr.rel (%p217) target = $region28
        $region27: #{tpu_custom_call.1} parent=23 // pred_region
          %s220 = sand.u32 %s16, 1
          %s221 = scalar_lea.sflag [#allocation7], %s220
          %s222 = sand.u32 %s64, 1
          %s223 = smul.addr %s222, 64
          %s224 = scalar_lea.vmem [#allocation6], %s223
          %s226 = ssub.s32 1024, 1024
          %227 = vsyncadd %s221, %s226
          %s228 = smul.addr %s24, 64
          %s229 = scalar_lea.hbm %s1, %s228
          %s230 = sshll.u32 %s224, 4
          %s231 = int_to_ptr.vmem [resolvable:$true] %s230
          %236 = dma.hbm_to_vmem [thread:$0]  %s229, 1024, %s231, %s221, 128, 64, 4
        $region28: #{tpu_custom_call.1} parent=23 // pred_fallthru
          _
        // Predicated region
        $region29: #{tpu_custom_call.1} parent=23 // pred_check
          %p237 = pneg %p100
        $region30: #{tpu_custom_call.1} parent=23 // pred_check_branch
          %239 = sbr.rel (%p237) target = $region32
        $region31: #{tpu_custom_call.1} parent=23 // pred_region
          %p240 = scmp.lt.s32.totalorder %s24, 1
          %s241 = scalar_select %p240, %s24, 1
          %s242 = scalar_lea.vmem %s2, %s241
        $region32: #{tpu_custom_call.1} parent=23 // pred_fallthru
          _
        // Predicated region
        $region33: #{tpu_custom_call.1} parent=23 // pred_check
          %p243 = pneg %p126
        $region34: #{tpu_custom_call.1} parent=23 // pred_check_branch
          %245 = sbr.rel (%p243) target = $region36
        $region35: #{tpu_custom_call.1} parent=23 // pred_region
          %s246 = sand.u32 %s16, 1
          %s247 = scalar_lea.sflag [#allocation7], %s246
          %s248 = sand.u32 %s116, 1
          %s249 = smul.addr %s248, 64
          %s250 = scalar_lea.vmem [#allocation8], %s249
          %s251 = smul.u32 16, %s24
          %s253 = ssub.s32 1024, 1024
          %254 = vsyncadd %s247, %s253
          %s255 = smul.addr %s251, 64
          %s256 = scalar_lea.hbm %s3, %s255
          %s257 = sshll.u32 %s250, 4
          %s258 = int_to_ptr.vmem [resolvable:$true] %s257
          %263 = dma.hbm_to_vmem [thread:$0]  %s256, 1024, %s258, %s247, 64, 64, 4
        $region36: #{tpu_custom_call.1} parent=23 // pred_fallthru
          _
      $region24: #{tpu_custom_call.1} parent=5 // pred_fallthru
        _
      %p264 = scmp.le.s32.totalorder 1, %s16
      %p265 = scmp.lt.s32.totalorder %s16, 3
      %p266 = pnand %p264, %p265
      %p267 = pneg %p266
      // Predicated region
      $region37: #{tpu_custom_call.1} parent=5 // pred_check
        _
      $region38: #{tpu_custom_call.1} parent=5 // pred_check_branch
        %269 = sbr.rel (%p266) target = $region40
      $region39: #{tpu_custom_call.1} parent=5 // pred_region
        %s270 = ssub.s32 %s16, 1
        // Predicated region
        $region41: #{tpu_custom_call.1} parent=39 // pred_check
          %p271 = pneg %p54
        $region42: #{tpu_custom_call.1} parent=39 // pred_check_branch
          %273 = sbr.rel (%p271) target = $region44
        $region43: #{tpu_custom_call.1} parent=39 // pred_region
          %274 = dma.done [#allocation4], 128
        $region44: #{tpu_custom_call.1} parent=39 // pred_fallthru
          _
        %s275 = sand.u32 %s21, 1
        %s276 = scalar_lea.sflag [#allocation7], %s275
        %s277 = sand.u32 %s67, 1
        %s278 = smul.addr %s277, 64
        %s279 = scalar_lea.vmem [#allocation6], %s278
        // Predicated region
        $region45: #{tpu_custom_call.1} parent=39 // pred_check
          %p280 = pneg %p80
        $region46: #{tpu_custom_call.1} parent=39 // pred_check_branch
          %282 = sbr.rel (%p280) target = $region48
        $region47: #{tpu_custom_call.1} parent=39 // pred_region
          %283 = dma.done %s276, 1024
        $region48: #{tpu_custom_call.1} parent=39 // pred_fallthru
          _
        %s284 = sand.u32 %s21, 1
        %s285 = scalar_lea.sflag [#allocation7], %s284
        %s286 = sand.u32 %s119, 1
        %s287 = smul.addr %s286, 64
        %s288 = scalar_lea.vmem [#allocation8], %s287
        // Predicated region
        $region49: #{tpu_custom_call.1} parent=39 // pred_check
          %p289 = pneg %p132
        $region50: #{tpu_custom_call.1} parent=39 // pred_check_branch
          %291 = sbr.rel (%p289) target = $region52
        $region51: #{tpu_custom_call.1} parent=39 // pred_region
          %292 = dma.done %s285, 1024
        $region52: #{tpu_custom_call.1} parent=39 // pred_fallthru
          _
        %p293 = pneg %p54
        %p294 = pneg %p51
        %s295 = sand.u32 %s21, 1
        %s296 = scalar_lea.sflag [#allocation7], %s295
        %s297 = sand.u32 %s67, 1
        %s298 = smul.addr %s297, 64
        %s299 = scalar_lea.vmem [#allocation6], %s298
        %p300 = pneg %p80
        %p301 = pneg %p77
        %p302 = scmp.lt.s32.totalorder %s26, 1
        %s303 = scalar_select %p302, %s26, 1
        %s304 = scalar_lea.vmem %s2, %s303
        %p305 = pneg %p106
        %p306 = pneg %p103
        %s307 = sand.u32 %s21, 1
        %s308 = scalar_lea.sflag [#allocation7], %s307
        %s309 = sand.u32 %s119, 1
        %s310 = smul.addr %s309, 64
        %s311 = scalar_lea.vmem [#allocation8], %s310
        %p312 = pneg %p132
        %p313 = pneg %p129
        %p314 = pneg %p153
        %p315 = pneg %p150
        %p316 = pneg %p179
        %p317 = pneg %p176
        %s318 = smul.u32 2, %s25
        %p319 = scmp.lt.s32.totalorder %s26, 1
        %s320 = scalar_select %p319, %s26, 1
        %s321 = scalar_lea.vmem %s2, %s320
        %s322 = smul.u32 16, %s26
        %s323 = smul.u32 2, %s25
        %v325 = vld [vmem:[#allocation3] sm:$0xf]
        %v326 = vld [vmem:[#allocation3 + $0x4] sm:$0xf]
        %v327 = vld [vmem:[%s279] sm:$0xf]
        %v328 = vld [vmem:[%s279 + $0x4] sm:$0xf]
        %v329 = vld [vmem:[%s279 + $0x8] sm:$0xf]
        %v330 = vld [vmem:[%s279 + $0xc] sm:$0xf]
        %v331 = vld [vmem:[%s279 + $0x10] sm:$0xf]
        %v332 = vld [vmem:[%s279 + $0x14] sm:$0xf]
        %v333 = vld [vmem:[%s279 + $0x18] sm:$0xf]
        %v334 = vld [vmem:[%s279 + $0x1c] sm:$0xf]
        %v335 = vld [vmem:[%s279 + $0x20] sm:$0xf]
        %v336 = vld [vmem:[%s279 + $0x24] sm:$0xf]
        %v337 = vld [vmem:[%s279 + $0x28] sm:$0xf]
        %v338 = vld [vmem:[%s279 + $0x2c] sm:$0xf]
        %v339 = vld [vmem:[%s279 + $0x30] sm:$0xf]
        %v340 = vld [vmem:[%s279 + $0x34] sm:$0xf]
        %v341 = vld [vmem:[%s279 + $0x38] sm:$0xf]
        %v342 = vld [vmem:[%s279 + $0x3c] sm:$0xf]
        %v343 = vld [vmem:[%s321] sm:$0x1]
        %v345 = vlaneseq
        %v346 = vshrl.u32 %v345, 7
        %v347 = vsub.s32 0, %v346
        %v348 = vrot.slane %v343, %v347
        %v352 = vunpack.c.l.b16 %v325
        %v353 = vunpack.c.l.b16 %v326
        %v354 = vpack.c.b16 %v353, %v352
        %v372 = vunpack.c.l.b16 %v327
        %v373 = vunpack.c.l.b16 %v328
        %v374 = vunpack.c.l.b16 %v329
        %v375 = vunpack.c.l.b16 %v330
        %v376 = vunpack.c.l.b16 %v331
        %v377 = vunpack.c.l.b16 %v332
        %v378 = vunpack.c.l.b16 %v333
        %v379 = vunpack.c.l.b16 %v334
        %v380 = vunpack.c.l.b16 %v335
        %v381 = vunpack.c.l.b16 %v336
        %v382 = vunpack.c.l.b16 %v337
        %v383 = vunpack.c.l.b16 %v338
        %v384 = vunpack.c.l.b16 %v339
        %v385 = vunpack.c.l.b16 %v340
        %v386 = vunpack.c.l.b16 %v341
        %v387 = vunpack.c.l.b16 %v342
        %v388 = vpack.c.b16 %v373, %v372
        %v389 = vpack.c.b16 %v375, %v374
        %v390 = vpack.c.b16 %v377, %v376
        %v391 = vpack.c.b16 %v379, %v378
        %v392 = vpack.c.b16 %v381, %v380
        %v393 = vpack.c.b16 %v383, %v382
        %v394 = vpack.c.b16 %v385, %v384
        %v395 = vpack.c.b16 %v387, %v386
        %404 = vmatprep.subr.bf16.mxu0 0
        %405 = vmatpush1.bf16.msra.mxu0 %v388
        %406 = vmatprep.subr.bf16.mxu0 0
        %407 = vmatpush1.bf16.msra.mxu0 %v389
        %408 = vmatprep.subr.bf16.mxu0 0
        %409 = vmatpush1.bf16.msra.mxu0 %v390
        %410 = vmatprep.subr.bf16.mxu0 0
        %411 = vmatpush1.bf16.msra.mxu0 %v391
        %412 = vmatprep.subr.bf16.mxu0 0
        %413 = vmatpush1.bf16.msra.mxu0 %v392
        %414 = vmatprep.subr.bf16.mxu0 0
        %415 = vmatpush1.bf16.msra.mxu0 %v393
        %416 = vmatprep.subr.bf16.mxu0 0
        %417 = vmatpush1.bf16.msra.mxu0 %v394
        %418 = vmatprep.subr.bf16.mxu0 0
        %419 = vmatpush1.bf16.msra.mxu0 %v395
        %420 = vmatprep.subr.bf16.mxu0 0
        %421 = vmatpush1.bf16.msra.mxu0 0
        %422 = vmatprep.subr.bf16.mxu0 0
        %423 = vmatpush1.bf16.msra.mxu0 0
        %424 = vmatprep.subr.bf16.mxu0 0
        %425 = vmatpush1.bf16.msra.mxu0 0
        %426 = vmatprep.subr.bf16.mxu0 0
        %427 = vmatpush1.bf16.msra.mxu0 0
        %428 = vmatprep.subr.bf16.mxu0 0
        %429 = vmatpush1.bf16.msra.mxu0 0
        %430 = vmatprep.subr.bf16.mxu0 0
        %431 = vmatpush1.bf16.msra.mxu0 0
        %432 = vmatprep.subr.bf16.mxu0 0
        %433 = vmatpush1.bf16.msra.mxu0 0
        %434 = vmatprep.subr.bf16.mxu0 0
        %435 = vmatpush1.bf16.msra.mxu0 0
        %436 = vmatprep.mubr.bf16.mxu0 0
        %437 = vmatmul.mubr.bf16.gmra.mrb[0].mxu0 %v354
        %v438 = vpop.f32.mrb[0].mxu0
        %v439 = vadd.f32 %v348, %v438
        %v440 = vpop.f32.mrb[0].mxu0
        %v441 = vpop.f32.mrb[0].mxu0
        %v442 = vadd.f32 %v348, %v441
        %v443 = vpop.f32.mrb[0].mxu0
        %444 = vdwg.mxu0
        %v445 = vmul.f32 %v439, 0.5
        %v446 = vmul.f32 %v442, 0.5
        %v447 = vmul.f32 %v439, 0.70710677
        %v448 = vmul.f32 %v442, 0.70710677
        %v449 = verf.f32.pop %v447
        %v450 = verf.f32.pop %v448
        %v451 = vadd.f32 %v449, 1.0
        %v452 = vadd.f32 %v450, 1.0
        %v453 = vmul.f32 %v445, %v451
        %v454 = vmul.f32 %v446, %v452
        %v455 = vpack.c.bf16 %v454, %v453
        %v456 = vld [vmem:[%s288] sm:$0xf]
        %v457 = vld [vmem:[%s288 + $0x4] sm:$0xf]
        %v458 = vld [vmem:[%s288 + $0x8] sm:$0xf]
        %v459 = vld [vmem:[%s288 + $0xc] sm:$0xf]
        %v460 = vld [vmem:[%s288 + $0x10] sm:$0xf]
        %v461 = vld [vmem:[%s288 + $0x14] sm:$0xf]
        %v462 = vld [vmem:[%s288 + $0x18] sm:$0xf]
        %v463 = vld [vmem:[%s288 + $0x1c] sm:$0xf]
        %v464 = vld [vmem:[%s288 + $0x20] sm:$0xf]
        %v465 = vld [vmem:[%s288 + $0x24] sm:$0xf]
        %v466 = vld [vmem:[%s288 + $0x28] sm:$0xf]
        %v467 = vld [vmem:[%s288 + $0x2c] sm:$0xf]
        %v468 = vld [vmem:[%s288 + $0x30] sm:$0xf]
        %v469 = vld [vmem:[%s288 + $0x34] sm:$0xf]
        %v470 = vld [vmem:[%s288 + $0x38] sm:$0xf]
        %v471 = vld [vmem:[%s288 + $0x3c] sm:$0xf]
        %v488 = vunpack.c.l.b16 %v456
        %v489 = vunpack.c.l.b16 %v457
        %v490 = vunpack.c.l.b16 %v458
        %v491 = vunpack.c.l.b16 %v459
        %v492 = vunpack.c.l.b16 %v460
        %v493 = vunpack.c.l.b16 %v461
        %v494 = vunpack.c.l.b16 %v462
        %v495 = vunpack.c.l.b16 %v463
        %v496 = vunpack.c.l.b16 %v464
        %v497 = vunpack.c.l.b16 %v465
        %v498 = vunpack.c.l.b16 %v466
        %v499 = vunpack.c.l.b16 %v467
        %v500 = vunpack.c.l.b16 %v468
        %v501 = vunpack.c.l.b16 %v469
        %v502 = vunpack.c.l.b16 %v470
        %v503 = vunpack.c.l.b16 %v471
        %v504 = vpack.c.b16 %v489, %v488
        %v505 = vpack.c.b16 %v491, %v490
        %v506 = vpack.c.b16 %v493, %v492
        %v507 = vpack.c.b16 %v495, %v494
        %v508 = vpack.c.b16 %v497, %v496
        %v509 = vpack.c.b16 %v499, %v498
        %v510 = vpack.c.b16 %v501, %v500
        %v511 = vpack.c.b16 %v503, %v502
        %520 = vmatprep.subr.bf16.mxu0 0
        %521 = vmatpush1.bf16.msra.mxu0 %v504
        %522 = vmatprep.subr.bf16.mxu0 0
        %523 = vmatpush1.bf16.msra.mxu0 %v505
        %524 = vmatprep.subr.bf16.mxu0 0
        %525 = vmatpush1.bf16.msra.mxu0 %v506
        %526 = vmatprep.subr.bf16.mxu0 0
        %527 = vmatpush1.bf16.msra.mxu0 %v507
        %528 = vmatprep.subr.bf16.mxu0 0
        %529 = vmatpush1.bf16.msra.mxu0 %v508
        %530 = vmatprep.subr.bf16.mxu0 0
        %531 = vmatpush1.bf16.msra.mxu0 %v509
        %532 = vmatprep.subr.bf16.mxu0 0
        %533 = vmatpush1.bf16.msra.mxu0 %v510
        %534 = vmatprep.subr.bf16.mxu0 0
        %535 = vmatpush1.bf16.msra.mxu0 %v511
        %536 = vmatprep.subr.bf16.mxu0 0
        %537 = vmatpush1.bf16.msra.mxu0 0
        %538 = vmatprep.subr.bf16.mxu0 0
        %539 = vmatpush1.bf16.msra.mxu0 0
        %540 = vmatprep.subr.bf16.mxu0 0
        %541 = vmatpush1.bf16.msra.mxu0 0
        %542 = vmatprep.subr.bf16.mxu0 0
        %543 = vmatpush1.bf16.msra.mxu0 0
        %544 = vmatprep.subr.bf16.mxu0 0
        %545 = vmatpush1.bf16.msra.mxu0 0
        %546 = vmatprep.subr.bf16.mxu0 0
        %547 = vmatpush1.bf16.msra.mxu0 0
        %548 = vmatprep.subr.bf16.mxu0 0
        %549 = vmatpush1.bf16.msra.mxu0 0
        %550 = vmatprep.subr.bf16.mxu0 0
        %551 = vmatpush1.bf16.msra.mxu0 0
        %552 = vmatprep.mubr.bf16.mxu0 0
        %553 = vmatmul.mubr.bf16.gmra.mrb[0].mxu0 %v455
        %v554 = vpop.f32.mrb[0].mxu0
        %v555 = vadd.f32 0.0, %v554
        %v556 = vpop.f32.mrb[0].mxu0
        %v557 = vpop.f32.mrb[0].mxu0
        %v558 = vadd.f32 0.0, %v557
        %v559 = vpop.f32.mrb[0].mxu0
        %560 = vdwg.mxu0
        %p561 = scmp.eq.s32.totalorder %s26, 0
        // Predicated region
        $region53: #{tpu_custom_call.1} parent=39 // pred_check
          %p562 = pneg %p561
        $region54: #{tpu_custom_call.1} parent=39 // pred_check_branch
          %564 = sbr.rel (%p562) target = $region56
        $region55: #{tpu_custom_call.1} parent=39 // pred_region
          %565 = vst [vmem:[#allocation2] sm:$0xff] %v555
          %566 = vst [vmem:[#allocation2 + $0x8] sm:$0xff] %v558
        $region56: #{tpu_custom_call.1} parent=39 // pred_fallthru
          _
        %p567 = scmp.gt.s32.totalorder %s26, 0
        %p568 = scmp.lt.s32.totalorder %s26, 1
        %p569 = pnand %p567, %p568
        %p570 = pneg %p569
        // Predicated region
        $region57: #{tpu_custom_call.1} parent=39 // pred_check
          _
        $region58: #{tpu_custom_call.1} parent=39 // pred_check_branch
          %572 = sbr.rel (%p569) target = $region60
        $region59: #{tpu_custom_call.1} parent=39 // pred_region
          %v573 = vld [vmem:[#allocation2] sm:$0xff]
          %v574 = vld [vmem:[#allocation2 + $0x8] sm:$0xff]
          %v575 = vadd.f32 %v573, %v555
          %v576 = vadd.f32 %v574, %v558
          %577 = vst [vmem:[#allocation2] sm:$0xff] %v575
          %578 = vst [vmem:[#allocation2 + $0x8] sm:$0xff] %v576
        $region60: #{tpu_custom_call.1} parent=39 // pred_fallthru
          _
        %p579 = scmp.eq.s32.totalorder %s26, 1
        // Predicated region
        $region61: #{tpu_custom_call.1} parent=39 // pred_check
          %p580 = pneg %p579
        $region62: #{tpu_custom_call.1} parent=39 // pred_check_branch
          %582 = sbr.rel (%p580) target = $region64
        $region63: #{tpu_custom_call.1} parent=39 // pred_region
          %v583 = vld [vmem:[#allocation2] sm:$0xff]
          %v584 = vld [vmem:[#allocation2 + $0x8] sm:$0xff]
          %v585 = vadd.f32 %v583, %v555
          %v586 = vadd.f32 %v584, %v558
          %v587 = vld [vmem:[%s4] sm:$0x1]
          %v589 = vlaneseq
          %v590 = vshrl.u32 %v589, 7
          %v591 = vsub.s32 0, %v590
          %v592 = vrot.slane %v587, %v591
          %v594 = vadd.f32 %v585, %v592
          %v595 = vadd.f32 %v586, %v592
          %596 = vst [vmem:[#allocation9] sm:$0xff] %v594
          %597 = vst [vmem:[#allocation9 + $0x8] sm:$0xff] %v595
        $region64: #{tpu_custom_call.1} parent=39 // pred_fallthru
          _
        // Predicated region
        $region65: #{tpu_custom_call.1} parent=39 // pred_check
          %p598 = pneg %p176
        $region66: #{tpu_custom_call.1} parent=39 // pred_check_branch
          %600 = sbr.rel (%p598) target = $region68
        $region67: #{tpu_custom_call.1} parent=39 // pred_region
          %s601 = smul.u32 2, %s25
          %s603 = ssub.s32 256, 256
          %604 = vsyncadd [#allocation5], %s603
          %s605 = smul.addr %s601, 128
          %s606 = scalar_lea.hbm %s5, %s605
          %s607 = sshll.u32 [#allocation9], 4
          %s608 = int_to_ptr.vmem [resolvable:$true] %s607
          %613 = dma.vmem_to_hbm [thread:$0]  %s608, 256, %s606, [#allocation5], 128, 128, 8
        $region68: #{tpu_custom_call.1} parent=39 // pred_fallthru
          _
        // Predicated region
        $region69: #{tpu_custom_call.1} parent=39 // pred_check
          %p614 = pneg %p176
        $region70: #{tpu_custom_call.1} parent=39 // pred_check_branch
          %616 = sbr.rel (%p614) target = $region72
        $region71: #{tpu_custom_call.1} parent=39 // pred_region
          %617 = dma.done [#allocation5], 256
        $region72: #{tpu_custom_call.1} parent=39 // pred_fallthru
          _
      $region40: #{tpu_custom_call.1} parent=5 // pred_fallthru
        _
      %p618 = scmp.le.s32.totalorder 2, %s16
      // Predicated region
      $region73: #{tpu_custom_call.1} parent=5 // pred_check
        %p619 = pneg %p618
      $region74: #{tpu_custom_call.1} parent=5 // pred_check_branch
        %621 = sbr.rel (%p619) target = $region76
      $region75: #{tpu_custom_call.1} parent=5 // pred_region
        %s622 = ssub.s32 %s16, 2
      $region76: #{tpu_custom_call.1} parent=5 // pred_fallthru
        _
    $region6: #{tpu_custom_call.1} parent=1 // loop_footer
      %s20 = sadd.s32 1, %s16
    $region7: #{tpu_custom_call.1} parent=1 // loop_footer_branch
      %15 = sbr.rel target = $region3
    $region8: #{tpu_custom_call.1} parent=1 // loop_exit
      _
    %623 = vsyncpa [#allocation4], 1
    %s624 = scalar_lea.sflag [#allocation4], 1
    %625 = vsyncpa %s624, 1
    %626 = vsyncpa [#allocation7], 1
    %s627 = scalar_lea.sflag [#allocation7], 1
    %628 = vsyncpa %s627, 1
    %629 = vsyncpa [#allocation5], 1
    %s630 = scalar_lea.sflag [#allocation5], 1
    %631 = vsyncpa %s630, 1

</llo_original>
